<compile_context>
chip_gen: v6e
topology: v6e:2x2x1
jax: 0.10.0
libtpu: 0.0.40
codegen_flags: <defaults>
</compile_context>

<pallas_src>
import functools

import numpy as np
import jax
import jax.numpy as jnp
from jax.experimental import pallas as pl
from jax.experimental.pallas import tpu as pltpu


def _realnvp_kernel(num_hidden, input_dim, hidden_dim, mxu_dtype, *refs):
    if num_hidden > 0:
        x_ref, w_hidden_ref, w_final_ref, p_ref, out_ref = refs
    else:
        x_ref, w_final_ref, p_ref, out_ref = refs
        w_hidden_ref = None
    D = input_dim
    num_lin = num_hidden + 2

    x = x_ref[...]                              # (D, bm)   -- batch on lanes
    mask = p_ref[0:D, 0:1]                      # (D, 1)
    inv_mask = 1.0 - mask

    # ---- first layer (K = D is tiny): VPU broadcast FMAs, mask pre-folded into
    # the weight columns on the host so it operates on x directly.
    h = p_ref[:, D + 1:D + 2]                   # layer-0 bias, (2H, 1)
    for d in range(D):                          # static, D iterations
        h = h + p_ref[:, 1 + d:2 + d] * x[d:d + 1, :]
    h = jnp.maximum(h, 0.0)                     # (2H, bm) fused s|t activations

    # ---- hidden layers: block-diagonal fused s/t matmuls on the MXU
    # (bias-add + ReLU fused into result consumption; f32 accumulation).
    for l in range(num_hidden):                 # static loop
        w = w_hidden_ref[l]                     # (2H, 2H) block-diag(Ws_l, Wt_l)
        b = p_ref[:, D + 2 + l:D + 3 + l]       # (2H, 1)
        h = jnp.maximum(
            jnp.dot(w, h.astype(mxu_dtype),
                    preferred_element_type=jnp.float32) + b, 0.0)

    # ---- final layer, padded to 16 rows: s rows 0..D-1, t rows 8..8+D-1
    col_f = D + 1 + (num_lin - 1)
    w_f = w_final_ref[...]                      # (16, 2H)
    b_f = p_ref[0:16, col_f:col_f + 1]          # (16, 1)
    st = jnp.dot(w_f, h.astype(mxu_dtype),
                 preferred_element_type=jnp.float32) + b_f        # (16, bm)

    s_out = jnp.tanh(st[0:D, :]) * inv_mask                       # (D, bm)
    t_out = st[8:8 + D, :] * inv_mask                             # (D, bm)
    z1 = mask * x
    z_out = inv_mask * (x - t_out) * jnp.exp(-s_out) + z1         # (D, bm)

    # reductions over the (tiny) feature sublanes -> lane-dense (1, bm) row
    log_det_j = -jnp.sum(s_out, axis=0, keepdims=True)
    log_prob = (-0.5 * jnp.sum(z_out * z_out, axis=0, keepdims=True)
                - 0.5 * D * jnp.log(2.0 * jnp.pi))
    out_ref[...] = log_prob + log_det_j                           # (1, bm)


def _pick_block_batch(B, cap=8192):
    """Largest multiple of 128 dividing B, <= cap; prefer >=2 grid steps."""
    if B % 128 != 0:
        return B                         # ragged batch: one untiled grid step
    best = 128
    for cand in range(128, min(B, cap) + 1, 128):
        if B % cand == 0:
            best = cand
    # Keep at least 2 parallel grid steps where possible so v7x megacore
    # ("parallel" dimension semantics) can use both TensorCores.
    if best == B and B >= 256 and (B // 2) % 128 == 0:
        best = B // 2
    return best


def realnvp2d_forward(x, mask, s_params, t_params, *, block_batch=None,
                      use_bf16=False):
    """loss = prior.log_prob(z) + log_det_J, shape (batch,).

    s_params / t_params: lists of (W, b) with W in PyTorch (out, in) layout.
    use_bf16: feed the MXU bf16 operands (f32 accumulation); looser numerics.
    """
    B, D = x.shape
    num_lin = len(s_params)
    assert len(t_params) == num_lin and num_lin >= 2
    H = s_params[0][0].shape[0]          # intermediateDimension
    assert 2 * H >= 16, "intermediateDimension must be >= 8"
    num_hidden = num_lin - 2
    H2 = 2 * H
    f32 = jnp.float32
    mxu_dtype = jnp.bfloat16 if use_bf16 else jnp.float32

    mask_row = jnp.asarray(mask, f32).reshape(D)

    # ---- fuse the s/t networks (shared input z1) + fold mask into layer 0 ----
    w_first = jnp.concatenate(
        [s_params[0][0].astype(f32), t_params[0][0].astype(f32)], axis=0)  # (2H, D)
    w_first = w_first * mask_row[None, :]        # W @ (mask*x) == (W*mask) @ x

    if num_hidden > 0:
        zH = jnp.zeros((H, H), f32)
        blocks = []
        for i in range(1, 1 + num_hidden):
            ws = s_params[i][0].astype(f32)
            wt = t_params[i][0].astype(f32)
            blocks.append(jnp.concatenate([
                jnp.concatenate([ws, zH], axis=1),
                jnp.concatenate([zH, wt], axis=1)], axis=0))               # (2H, 2H)
        w_hidden = jnp.stack(blocks, axis=0).astype(mxu_dtype)             # (nh, 2H, 2H)
    else:
        w_hidden = None                                                    # dropped

    # final layer padded to 16 rows for 8-sublane-aligned s/t split
    w_final = jnp.zeros((16, H2), f32)
    w_final = w_final.at[0:D, 0:H].set(s_params[-1][0].astype(f32))
    w_final = w_final.at[8:8 + D, H:H2].set(t_params[-1][0].astype(f32))
    w_final = w_final.astype(mxu_dtype)                                    # (16, 2H)

    # ---- ONE packed small-parameter buffer: [mask | w_first | biases] -------
    n_cols = 1 + D + num_lin
    p_small = jnp.zeros((H2, n_cols), f32)
    p_small = p_small.at[0:D, 0].set(mask_row)
    p_small = p_small.at[:, 1:1 + D].set(w_first)
    for i in range(num_lin - 1):                 # first + hidden layer biases
        col = jnp.concatenate(
            [s_params[i][1].astype(f32), t_params[i][1].astype(f32)], axis=0)
        p_small = p_small.at[:, 1 + D + i].set(col)
    # final-layer bias in the padded 16-row layout
    p_small = p_small.at[0:D, 1 + D + num_lin - 1].set(s_params[-1][1].astype(f32))
    p_small = p_small.at[8:8 + D, 1 + D + num_lin - 1].set(t_params[-1][1].astype(f32))

    # ---- batch-on-lanes layout (layout plumbing only; kernel is compute-bound)
    x_t = x.T.astype(f32)                        # (D, B)

    if block_batch is None:
        block_batch = _pick_block_batch(B)
    if block_batch != B:
        assert block_batch % 128 == 0 and B % block_batch == 0, (
            "block_batch must divide B and be a multiple of 128 (or equal B)")
    grid = (B // block_batch,)

    kernel = functools.partial(_realnvp_kernel, num_hidden, D, H, mxu_dtype)

    def whole(arr):
        nd = arr.ndim
        return pl.BlockSpec(arr.shape, lambda i, _nd=nd: (0,) * _nd)

    inputs = [x_t]
    in_specs = [pl.BlockSpec((D, block_batch), lambda i: (0, i))]
    if num_hidden > 0:
        inputs.append(w_hidden)
        in_specs.append(whole(w_hidden))
    inputs += [w_final, p_small]
    in_specs += [whole(w_final), whole(p_small)]

    itemsize = 2 if use_bf16 else 4
    weight_bytes = ((num_hidden * H2 * H2 * itemsize)
                    + 16 * H2 * itemsize + H2 * n_cols * 4)
    cost = pl.CostEstimate(
        flops=int(B * (2 * H2 * D + num_hidden * 2 * H2 * H2
                       + 2 * 16 * H2 + 16 * D)),
        transcendentals=int(2 * B * D),
        bytes_accessed=int(B * (D + 1) * 4 + weight_bytes))

    out = pl.pallas_call(
        kernel,
        out_shape=jax.ShapeDtypeStruct((1, B), jnp.float32),
        grid=grid,
        in_specs=in_specs,
        out_specs=pl.BlockSpec((1, block_batch), lambda i: (0, i)),  # lane-dense
        compiler_params=pltpu.CompilerParams(
            dimension_semantics=("parallel",),
            vmem_limit_bytes=32 * 1024 * 1024),
        cost_estimate=cost,
    )(*inputs)
    return out[0]


# -------------------- high-precision reference (for verification) --------------------
def _ref_forward_np(x, mask, s_params, t_params):
    x = np.asarray(x, np.float64)
    m = np.asarray(mask, np.float64).reshape(1, -1)

    def mlp(h, params, final_tanh):
        n = len(params)
        for i, (w, b) in enumerate(params):
            w = np.asarray(w, np.float64)
            b = np.asarray(b, np.float64)
            h = h @ w.T + b
            if i < n - 1:
                h = np.maximum(h, 0.0)
            elif final_tanh:
                h = np.tanh(h)
        return h

    D = x.shape[1]
    z1 = m * x
    s_out = mlp(z1, s_params, True) * (1.0 - m)
    t_out = mlp(z1, t_params, False) * (1.0 - m)
    z_out = (1.0 - m) * (x - t_out) * np.exp(-s_out) + z1
    log_det = -s_out.sum(axis=1)
    log_prob = -0.5 * (z_out * z_out).sum(axis=1) - 0.5 * D * np.log(2.0 * np.pi)
    return (log_prob + log_det).astype(np.float32)


def _init_linear(key, in_dim, out_dim):
    # PyTorch nn.Linear default init: U(-1/sqrt(fan_in), 1/sqrt(fan_in)); W is (out, in)
    k = 1.0 / np.sqrt(in_dim)
    kw, kb = jax.random.split(key)
    w = jax.random.uniform(kw, (out_dim, in_dim), jnp.float32, -k, k)
    b = jax.random.uniform(kb, (out_dim,), jnp.float32, -k, k)
    return w, b


if __name__ == "__main__":
    # Module hyper-parameters (small, consistent with a 2-D RealNVP flow):
    input_dim = 2        # inputDim
    hidden = 32          # intermediateDimension
    num_s_layers = 2     # numberOfSLayers == numberOfTLayers
    batch = 256          # lane-aligned; block picker gives a 2-step parallel grid

    key = jax.random.PRNGKey(0)
    key, kx = jax.random.split(key)
    x = jax.random.normal(kx, (batch, input_dim), jnp.float32)
    mask = jnp.array([1.0, 0.0], dtype=jnp.float32)   # coupling-layer mask

    # Linear-layer dims: FirstLayer, intermediateLayers*N, finalLayer
    dims = [(input_dim, hidden)] + [(hidden, hidden)] * num_s_layers + [(hidden, input_dim)]
    s_params, t_params = [], []
    for din, dout in dims:
        key, k1 = jax.random.split(key)
        s_params.append(_init_linear(k1, din, dout))
    for din, dout in dims:
        key, k1 = jax.random.split(key)
        t_params.append(_init_linear(k1, din, dout))

    ref = _ref_forward_np(x, mask, s_params, t_params)

    # f32 MXU path (default): tight tolerance.
    loss = realnvp2d_forward(x, mask, s_params, t_params)
    jax.block_until_ready(loss)
    np.testing.assert_allclose(np.asarray(loss), ref, rtol=1e-4, atol=1e-4)

    # bf16 MXU path (opt-in perf mode): looser tolerance.
    loss_bf16 = realnvp2d_forward(x, mask, s_params, t_params, use_bf16=True)
    jax.block_until_ready(loss_bf16)
    np.testing.assert_allclose(np.asarray(loss_bf16), ref, rtol=5e-2, atol=5e-2)

    print("KERNEL_OK")
</pallas_src>

<mosaic_0001>
module attributes {stable_mosaic.version = 11 : i64} {
  func.func @_realnvp_kernel(%arg0: i32, %arg1: memref<2x128xf32, #tpu.memory_space<vmem>>, %arg2: memref<2x64x64xf32, #tpu.memory_space<vmem>>, %arg3: memref<16x64xf32, #tpu.memory_space<vmem>>, %arg4: memref<64x7xf32, #tpu.memory_space<vmem>>, %arg5: memref<1x128xf32, #tpu.memory_space<vmem>>) attributes {dimension_semantics = [#tpu.dimension_semantics<parallel>], iteration_bounds = array<i64: 2>, scalar_prefetch = 0 : i64, scratch_operands = 0 : i64, tpu.core_type = #tpu.core_type<tc>, window_params = [{transform_indices = @transform_0, window_bounds = array<i64: 2, 128>}, {pipeline_mode = #tpu.pipeline_mode<synchronous>, transform_indices = @transform_1, window_bounds = array<i64: 2, 64, 64>}, {pipeline_mode = #tpu.pipeline_mode<synchronous>, transform_indices = @transform_2, window_bounds = array<i64: 16, 64>}, {pipeline_mode = #tpu.pipeline_mode<synchronous>, transform_indices = @transform_3, window_bounds = array<i64: 64, 7>}, {transform_indices = @transform_4, window_bounds = array<i64: 1, 128>}]} {
    %c0 = arith.constant 0 : index
    %c0_0 = arith.constant 0 : index
    %0 = vector.load %arg1[%c0, %c0_0] : memref<2x128xf32, #tpu.memory_space<vmem>>, vector<2x128xf32>
    %c0_1 = arith.constant 0 : index
    %c0_2 = arith.constant 0 : index
    %1 = vector.load %arg4[%c0_1, %c0_2] : memref<64x7xf32, #tpu.memory_space<vmem>>, vector<2x1xf32>
    %cst = arith.constant 1.000000e+00 : f32
    %2 = vector.broadcast %cst : f32 to vector<2x1xf32>
    %3 = arith.subf %2, %1 : vector<2x1xf32>
    %c0_3 = arith.constant 0 : index
    %c3 = arith.constant 3 : index
    %4 = vector.load %arg4[%c0_3, %c3] : memref<64x7xf32, #tpu.memory_space<vmem>>, vector<64x1xf32>
    %c0_4 = arith.constant 0 : index
    %c1 = arith.constant 1 : index
    %5 = vector.load %arg4[%c0_4, %c1] : memref<64x7xf32, #tpu.memory_space<vmem>>, vector<64x1xf32>
    %6 = vector.extract_strided_slice %0 {offsets = [0, 0], sizes = [1, 128], strides = [1, 1]} : vector<2x128xf32> to vector<1x128xf32>
    %7 = vector.broadcast %5 : vector<64x1xf32> to vector<64x128xf32>
    %8 = vector.broadcast %6 : vector<1x128xf32> to vector<64x128xf32>
    %9 = arith.mulf %7, %8 : vector<64x128xf32>
    %10 = vector.broadcast %4 : vector<64x1xf32> to vector<64x128xf32>
    %11 = arith.addf %10, %9 : vector<64x128xf32>
    %c0_5 = arith.constant 0 : index
    %c2 = arith.constant 2 : index
    %12 = vector.load %arg4[%c0_5, %c2] : memref<64x7xf32, #tpu.memory_space<vmem>>, vector<64x1xf32>
    %13 = vector.extract_strided_slice %0 {offsets = [1, 0], sizes = [1, 128], strides = [1, 1]} : vector<2x128xf32> to vector<1x128xf32>
    %14 = vector.broadcast %12 : vector<64x1xf32> to vector<64x128xf32>
    %15 = vector.broadcast %13 : vector<1x128xf32> to vector<64x128xf32>
    %16 = arith.mulf %14, %15 : vector<64x128xf32>
    %17 = arith.addf %11, %16 : vector<64x128xf32>
    %cst_6 = arith.constant 0.000000e+00 : f32
    %18 = vector.broadcast %cst_6 : f32 to vector<64x128xf32>
    %19 = arith.maximumf %17, %18 : vector<64x128xf32>
    %c0_7 = arith.constant 0 : index
    %c0_8 = arith.constant 0 : index
    %c0_9 = arith.constant 0 : index
    %20 = vector.load %arg2[%c0_7, %c0_8, %c0_9] : memref<2x64x64xf32, #tpu.memory_space<vmem>>, vector<1x64x64xf32>
    %21 = vector.shape_cast %20 : vector<1x64x64xf32> to vector<64x64xf32>
    %c0_10 = arith.constant 0 : index
    %c4 = arith.constant 4 : index
    %22 = vector.load %arg4[%c0_10, %c4] : memref<64x7xf32, #tpu.memory_space<vmem>>, vector<64x1xf32>
    %cst_11 = arith.constant dense<0.000000e+00> : vector<64x128xf32>
    %23 = tpu.matmul %21, %19, %cst_11 {dimension_numbers = #tpu.dot_dimension_numbers<[1], [0], [0], [1], [0, 0, 1, 1], [], []>} : vector<64x64xf32>, vector<64x128xf32>, vector<64x128xf32> -> vector<64x128xf32>
    %24 = vector.broadcast %22 : vector<64x1xf32> to vector<64x128xf32>
    %25 = arith.addf %23, %24 : vector<64x128xf32>
    %cst_12 = arith.constant 0.000000e+00 : f32
    %26 = vector.broadcast %cst_12 : f32 to vector<64x128xf32>
    %27 = arith.maximumf %25, %26 : vector<64x128xf32>
    %c1_13 = arith.constant 1 : index
    %c0_14 = arith.constant 0 : index
    %c0_15 = arith.constant 0 : index
    %28 = vector.load %arg2[%c1_13, %c0_14, %c0_15] : memref<2x64x64xf32, #tpu.memory_space<vmem>>, vector<1x64x64xf32>
    %29 = vector.shape_cast %28 : vector<1x64x64xf32> to vector<64x64xf32>
    %c0_16 = arith.constant 0 : index
    %c5 = arith.constant 5 : index
    %30 = vector.load %arg4[%c0_16, %c5] : memref<64x7xf32, #tpu.memory_space<vmem>>, vector<64x1xf32>
    %cst_17 = arith.constant dense<0.000000e+00> : vector<64x128xf32>
    %31 = tpu.matmul %29, %27, %cst_17 {dimension_numbers = #tpu.dot_dimension_numbers<[1], [0], [0], [1], [0, 0, 1, 1], [], []>} : vector<64x64xf32>, vector<64x128xf32>, vector<64x128xf32> -> vector<64x128xf32>
    %32 = vector.broadcast %30 : vector<64x1xf32> to vector<64x128xf32>
    %33 = arith.addf %31, %32 : vector<64x128xf32>
    %cst_18 = arith.constant 0.000000e+00 : f32
    %34 = vector.broadcast %cst_18 : f32 to vector<64x128xf32>
    %35 = arith.maximumf %33, %34 : vector<64x128xf32>
    %c0_19 = arith.constant 0 : index
    %c0_20 = arith.constant 0 : index
    %36 = vector.load %arg3[%c0_19, %c0_20] : memref<16x64xf32, #tpu.memory_space<vmem>>, vector<16x64xf32>
    %c0_21 = arith.constant 0 : index
    %c6 = arith.constant 6 : index
    %37 = vector.load %arg4[%c0_21, %c6] : memref<64x7xf32, #tpu.memory_space<vmem>>, vector<16x1xf32>
    %cst_22 = arith.constant dense<0.000000e+00> : vector<16x128xf32>
    %38 = tpu.matmul %36, %35, %cst_22 {dimension_numbers = #tpu.dot_dimension_numbers<[1], [0], [0], [1], [0, 0, 1, 1], [], []>} : vector<16x64xf32>, vector<64x128xf32>, vector<16x128xf32> -> vector<16x128xf32>
    %39 = vector.broadcast %37 : vector<16x1xf32> to vector<16x128xf32>
    %40 = arith.addf %38, %39 : vector<16x128xf32>
    %41 = vector.extract_strided_slice %40 {offsets = [0, 0], sizes = [2, 128], strides = [1, 1]} : vector<16x128xf32> to vector<2x128xf32>
    %42 = math.tanh %41 : vector<2x128xf32>
    %43 = vector.broadcast %3 : vector<2x1xf32> to vector<2x128xf32>
    %44 = arith.mulf %42, %43 : vector<2x128xf32>
    %45 = vector.extract_strided_slice %40 {offsets = [8, 0], sizes = [2, 128], strides = [1, 1]} : vector<16x128xf32> to vector<2x128xf32>
    %46 = vector.broadcast %3 : vector<2x1xf32> to vector<2x128xf32>
    %47 = arith.mulf %45, %46 : vector<2x128xf32>
    %48 = vector.broadcast %1 : vector<2x1xf32> to vector<2x128xf32>
    %49 = arith.mulf %48, %0 : vector<2x128xf32>
    %50 = arith.subf %0, %47 : vector<2x128xf32>
    %51 = vector.broadcast %3 : vector<2x1xf32> to vector<2x128xf32>
    %52 = arith.mulf %51, %50 : vector<2x128xf32>
    %cst_23 = arith.constant 0.000000e+00 : f32
    %53 = vector.broadcast %cst_23 : f32 to vector<2x128xf32>
    %54 = arith.subf %53, %44 : vector<2x128xf32>
    %55 = math.exp %54 : vector<2x128xf32>
    %56 = arith.mulf %52, %55 : vector<2x128xf32>
    %57 = arith.addf %56, %49 : vector<2x128xf32>
    %cst_24 = arith.constant dense<0.000000e+00> : vector<128xf32>
    %58 = vector.multi_reduction <add>, %44, %cst_24 [0] : vector<2x128xf32> to vector<128xf32>
    %59 = vector.shape_cast %58 : vector<128xf32> to vector<1x128xf32>
    %cst_25 = arith.constant 0.000000e+00 : f32
    %60 = vector.broadcast %cst_25 : f32 to vector<1x128xf32>
    %61 = arith.subf %60, %59 : vector<1x128xf32>
    %62 = arith.mulf %57, %57 : vector<2x128xf32>
    %cst_26 = arith.constant dense<0.000000e+00> : vector<128xf32>
    %63 = vector.multi_reduction <add>, %62, %cst_26 [0] : vector<2x128xf32> to vector<128xf32>
    %64 = vector.shape_cast %63 : vector<128xf32> to vector<1x128xf32>
    %cst_27 = arith.constant -5.000000e-01 : f32
    %65 = vector.broadcast %cst_27 : f32 to vector<1x128xf32>
    %66 = arith.mulf %65, %64 : vector<1x128xf32>
    %cst_28 = arith.constant 6.28318548 : f32
    %67 = math.log %cst_28 : f32
    %cst_29 = arith.constant 1.000000e+00 : f32
    %68 = arith.mulf %cst_29, %67 : f32
    %69 = vector.broadcast %68 : f32 to vector<1x128xf32>
    %70 = arith.subf %66, %69 : vector<1x128xf32>
    %71 = arith.addf %70, %61 : vector<1x128xf32>
    %c0_30 = arith.constant 0 : index
    %c0_31 = arith.constant 0 : index
    %72 = vector.load %arg5[%c0_30, %c0_31] : memref<1x128xf32, #tpu.memory_space<vmem>>, vector<1x128xf32>
    tpu.vector_store %arg5[%c0_30, %c0_31], %71 {strides = array<i32>} : memref<1x128xf32, #tpu.memory_space<vmem>>, vector<1x128xf32>,
    return
  }
  func.func @transform_0(%arg0: i32) -> (i32, i32) {
    %c0_i32 = arith.constant 0 : i32
    %c0_i32_0 = arith.constant 0 : i32
    return %c0_i32, %arg0 : i32, i32
  }
  func.func @transform_1(%arg0: i32) -> (i32, i32, i32) {
    %c0_i32 = arith.constant 0 : i32
    %c0_i32_0 = arith.constant 0 : i32
    %c0_i32_1 = arith.constant 0 : i32
    %c0_i32_2 = arith.constant 0 : i32
    return %c0_i32, %c0_i32_0, %c0_i32_1 : i32, i32, i32
  }
  func.func @transform_2(%arg0: i32) -> (i32, i32) {
    %c0_i32 = arith.constant 0 : i32
    %c0_i32_0 = arith.constant 0 : i32
    %c0_i32_1 = arith.constant 0 : i32
    return %c0_i32, %c0_i32_0 : i32, i32
  }
  func.func @transform_3(%arg0: i32) -> (i32, i32) {
    %c0_i32 = arith.constant 0 : i32
    %c0_i32_0 = arith.constant 0 : i32
    %c0_i32_1 = arith.constant 0 : i32
    return %c0_i32, %c0_i32_0 : i32, i32
  }
  func.func @transform_4(%arg0: i32) -> (i32, i32) {
    %c0_i32 = arith.constant 0 : i32
    %c0_i32_0 = arith.constant 0 : i32
    return %c0_i32, %arg0 : i32, i32
  }
}

</mosaic_0001>

<llo_original>
// kernel: tpu_custom_call.1
$region0: #{tpu_custom_call.1}
  #allocation0 [shape = 'u32[]', space=smem, size = 0x4, offset = 0x4, fixed_abs, tag = 'smem constant byte address 0x4 - core index']
  #allocation1 [shape = 'u32[144,128]{1,0:T(1,128)}', space=vmem, size = 0x12000, scoped, tag = 'internal scratch']
  %s0 = inlined_call_operand.vmem [shape: f32[2,256], index: 0, kind: input, shape index: {}]
  %s1 = inlined_call_operand.hbm [shape: f32[2,64,64], index: 1, kind: input, shape index: {}]
  %s2 = inlined_call_operand.vmem [shape: f32[16,64], index: 2, kind: input, shape index: {}]
  %s3 = inlined_call_operand.vmem [shape: f32[64,7], index: 3, kind: input, shape index: {}]
  %s4 = inlined_call_operand.hbm [shape: f32[1,256], index: 4, kind: output, shape index: {}]
  %s5 = sld [smem:[#allocation0]]
  $region53: #{tpu_custom_call.1} parent=0
    _
  %s7 = ssub.s32 1, %s5
  %s8 = scalar_select 0, %s7, %s5
  $region1: #{tpu_custom_call.1} parent=0
    #allocation2 [shape = 'u8[65536]{0}', space=vmem, size = 0x10000, scoped, tag = 'input window, operand 1, single buffered']
    #allocation3 [shape = 's32[2]{0}', space=sflag, size = 0x8, scoped, tag = 'scoped memory for tpu_custom_call.1']
    #allocation4 [shape = 's32[2]{0}', space=sflag, size = 0x8, scoped, tag = 'scoped memory for tpu_custom_call.1']
    #allocation5 [shape = 'u8[1024]{0}', space=vmem, size = 0x400, scoped, tag = 'output window, operand 0']
    %9 = vsyncpa [#allocation3], 0
    %10 = vsyncpa [#allocation4], 0
    %s11 = scalar_lea.sflag [#allocation4], 1
    %12 = vsyncpa %s11, 0
    loop: start=0, step=1, limit=4
    $region2: #{tpu_custom_call.1} parent=1 // loop_pre_header
      _
    $region3: #{tpu_custom_call.1} parent=1 // loop_header
      %s14 = sphi 0, %s18
      %p15 = scmp.ge.s32.totalorder %s14, 4
      %s24 = sphi 0, %s26
      %s27 = sphi 0, %s24
      %s28 = sphi 0, %s27
      %s44 = sphi 0, %s28
      %s48 = sphi 0, %s48
      %s50 = sphi 0, %s48
      %s51 = sphi 0, %s50
      %s65 = sphi 0, %s51
      %s69 = sphi 0, %s69
      %s71 = sphi 0, %s69
      %s72 = sphi 0, %s71
      %s86 = sphi 0, %s72
      %s90 = sphi 0, %s90
      %s92 = sphi 0, %s90
      %s93 = sphi 0, %s92
      %s107 = sphi 0, %s93
      %s113 = sphi 0, %s115
      %s116 = sphi 0, %s113
      %s117 = sphi 0, %s116
      %s133 = sphi 0, %s117
    $region4: #{tpu_custom_call.1} parent=1 // loop_header_branch
      %17 = sbr.rel (%p15) target = $region8
    $region5: #{tpu_custom_call.1} parent=1 // loop_body
      %s19 = ssub.s32 %s14, 1
      %s20 = ssub.s32 %s14, 2
      %s21 = sadd.s32 %s14, 1
      %s22 = ssub.s32 %s14, %s21
      %p23 = scmp.eq.s32.totalorder %s22, 0
      %s25 = sadd.s32 %s24, 1
      %s26 = scalar_select %p23, %s24, %s25
      %p29 = pneg %p23
      %p30 = scmp.eq.s32.totalorder %s14, 1
      %p31 = por %p29, %p30
      %p32 = scmp.ne.s32.totalorder %s24, %s27
      %p33 = scmp.eq.s32.totalorder %s14, 0
      %p34 = por %p32, %p33
      %p35 = scmp.ne.s32.totalorder %s24, %s27
      %p36 = scmp.eq.s32.totalorder %s19, 1
      %p37 = por %p35, %p36
      %p38 = scmp.ne.s32.totalorder %s27, %s28
      %p39 = scmp.eq.s32.totalorder %s19, 0
      %p40 = por %p38, %p39
      %p41 = scmp.ne.s32.totalorder %s27, %s28
      %p42 = scmp.eq.s32.totalorder %s20, 1
      %p43 = por %p41, %p42
      %p45 = scmp.ne.s32.totalorder %s28, %s44
      %p46 = scmp.eq.s32.totalorder %s20, 0
      %p47 = por %p45, %p46
      %s49 = sadd.s32 %s48, 1
      %p52 = scmp.eq.s32.totalorder %s14, 1
      %p53 = scmp.ne.s32.totalorder %s48, %s50
      %p54 = scmp.eq.s32.totalorder %s14, 0
      %p55 = por %p53, %p54
      %p56 = scmp.ne.s32.totalorder %s48, %s50
      %p57 = scmp.eq.s32.totalorder %s19, 1
      %p58 = por %p56, %p57
      %p59 = scmp.ne.s32.totalorder %s50, %s51
      %p60 = scmp.eq.s32.totalorder %s19, 0
      %p61 = por %p59, %p60
      %p62 = scmp.ne.s32.totalorder %s50, %s51
      %p63 = scmp.eq.s32.totalorder %s20, 1
      %p64 = por %p62, %p63
      %p66 = scmp.ne.s32.totalorder %s51, %s65
      %p67 = scmp.eq.s32.totalorder %s20, 0
      %p68 = por %p66, %p67
      %s70 = sadd.s32 %s69, 1
      %p73 = scmp.eq.s32.totalorder %s14, 1
      %p74 = scmp.ne.s32.totalorder %s69, %s71
      %p75 = scmp.eq.s32.totalorder %s14, 0
      %p76 = por %p74, %p75
      %p77 = scmp.ne.s32.totalorder %s69, %s71
      %p78 = scmp.eq.s32.totalorder %s19, 1
      %p79 = por %p77, %p78
      %p80 = scmp.ne.s32.totalorder %s71, %s72
      %p81 = scmp.eq.s32.totalorder %s19, 0
      %p82 = por %p80, %p81
      %p83 = scmp.ne.s32.totalorder %s71, %s72
      %p84 = scmp.eq.s32.totalorder %s20, 1
      %p85 = por %p83, %p84
      %p87 = scmp.ne.s32.totalorder %s72, %s86
      %p88 = scmp.eq.s32.totalorder %s20, 0
      %p89 = por %p87, %p88
      %s91 = sadd.s32 %s90, 1
      %p94 = scmp.eq.s32.totalorder %s14, 1
      %p95 = scmp.ne.s32.totalorder %s90, %s92
      %p96 = scmp.eq.s32.totalorder %s14, 0
      %p97 = por %p95, %p96
      %p98 = scmp.ne.s32.totalorder %s90, %s92
      %p99 = scmp.eq.s32.totalorder %s19, 1
      %p100 = por %p98, %p99
      %p101 = scmp.ne.s32.totalorder %s92, %s93
      %p102 = scmp.eq.s32.totalorder %s19, 0
      %p103 = por %p101, %p102
      %p104 = scmp.ne.s32.totalorder %s92, %s93
      %p105 = scmp.eq.s32.totalorder %s20, 1
      %p106 = por %p104, %p105
      %p108 = scmp.ne.s32.totalorder %s93, %s107
      %p109 = scmp.eq.s32.totalorder %s20, 0
      %p110 = por %p108, %p109
      %s111 = ssub.s32 %s14, %s21
      %p112 = scmp.eq.s32.totalorder %s111, 0
      %s114 = sadd.s32 %s113, 1
      %s115 = scalar_select %p112, %s113, %s114
      %p118 = pneg %p112
      %p119 = scmp.eq.s32.totalorder %s14, 1
      %p120 = por %p118, %p119
      %p121 = scmp.ne.s32.totalorder %s113, %s116
      %p122 = scmp.eq.s32.totalorder %s14, 0
      %p123 = por %p121, %p122
      %p124 = scmp.ne.s32.totalorder %s113, %s116
      %p125 = scmp.eq.s32.totalorder %s19, 1
      %p126 = por %p124, %p125
      %p127 = scmp.ne.s32.totalorder %s116, %s117
      %p128 = scmp.eq.s32.totalorder %s19, 0
      %p129 = por %p127, %p128
      %p130 = scmp.ne.s32.totalorder %s116, %s117
      %p131 = scmp.eq.s32.totalorder %s20, 1
      %p132 = por %p130, %p131
      %p134 = scmp.ne.s32.totalorder %s117, %s133
      %p135 = scmp.eq.s32.totalorder %s20, 0
      %p136 = por %p134, %p135
      %p137 = scmp.le.s32.totalorder 1, %s14
      %p138 = scmp.lt.s32.totalorder %s14, 3
      %p139 = pnand %p137, %p138
      %p140 = pneg %p139
      // Predicated region
      $region9: #{tpu_custom_call.1} parent=5 // pred_check
        _
      $region10: #{tpu_custom_call.1} parent=5 // pred_check_branch
        %142 = sbr.rel (%p139) target = $region12
      $region11: #{tpu_custom_call.1} parent=5 // pred_region
        %s143 = ssub.s32 %s14, 1
        // Predicated region
        $region13: #{tpu_custom_call.1} parent=11 // pred_check
          %p144 = pneg %p61
        $region14: #{tpu_custom_call.1} parent=11 // pred_check_branch
          %146 = sbr.rel (%p144) target = $region16
        $region15: #{tpu_custom_call.1} parent=11 // pred_region
          %s148 = ssub.s32 2048, 2048
          %149 = vsyncadd [#allocation3], %s148
          %s150 = sshll.u32 [#allocation2], 4
          %s151 = int_to_ptr.vmem [resolvable:$true] %s150
          %156 = dma.hbm_to_vmem [thread:$0]  %s1, 2048, %s151, [#allocation3], 128, 128, 8
        $region16: #{tpu_custom_call.1} parent=11 // pred_fallthru
          _
        // Predicated region
        $region17: #{tpu_custom_call.1} parent=11 // pred_check
          %p157 = pneg %p82
        $region18: #{tpu_custom_call.1} parent=11 // pred_check_branch
          %159 = sbr.rel (%p157) target = $region20
        $region19: #{tpu_custom_call.1} parent=11 // pred_region
          _
        $region20: #{tpu_custom_call.1} parent=11 // pred_fallthru
          _
        // Predicated region
        $region21: #{tpu_custom_call.1} parent=11 // pred_check
          %p160 = pneg %p103
        $region22: #{tpu_custom_call.1} parent=11 // pred_check_branch
          %162 = sbr.rel (%p160) target = $region24
        $region23: #{tpu_custom_call.1} parent=11 // pred_region
          _
        $region24: #{tpu_custom_call.1} parent=11 // pred_fallthru
          _
      $region12: #{tpu_custom_call.1} parent=5 // pred_fallthru
        _
      %p163 = scmp.lt.s32.totalorder %s14, 2
      // Predicated region
      $region25: #{tpu_custom_call.1} parent=5 // pred_check
        %p164 = pneg %p163
      $region26: #{tpu_custom_call.1} parent=5 // pred_check_branch
        %166 = sbr.rel (%p164) target = $region28
      $region27: #{tpu_custom_call.1} parent=5 // pred_region
        // Predicated region
        $region29: #{tpu_custom_call.1} parent=27 // pred_check
          %p167 = pneg %p34
        $region30: #{tpu_custom_call.1} parent=27 // pred_check_branch
          %169 = sbr.rel (%p167) target = $region32
        $region31: #{tpu_custom_call.1} parent=27 // pred_region
          %p170 = scmp.lt.s32.totalorder %s14, 1
          %s171 = scalar_select %p170, %s14, 1
          %s172 = smul.addr %s171, 2
          %s173 = scalar_lea.vmem %s0, %s172
        $region32: #{tpu_custom_call.1} parent=27 // pred_fallthru
          _
      $region28: #{tpu_custom_call.1} parent=5 // pred_fallthru
        _
      %p174 = scmp.le.s32.totalorder 1, %s14
      %p175 = scmp.lt.s32.totalorder %s14, 3
      %p176 = pnand %p174, %p175
      %p177 = pneg %p176
      // Predicated region
      $region33: #{tpu_custom_call.1} parent=5 // pred_check
        _
      $region34: #{tpu_custom_call.1} parent=5 // pred_check_branch
        %179 = sbr.rel (%p176) target = $region36
      $region35: #{tpu_custom_call.1} parent=5 // pred_region
        %s180 = ssub.s32 %s14, 1
        // Predicated region
        $region37: #{tpu_custom_call.1} parent=35 // pred_check
          %p181 = pneg %p61
        $region38: #{tpu_custom_call.1} parent=35 // pred_check_branch
          %183 = sbr.rel (%p181) target = $region40
        $region39: #{tpu_custom_call.1} parent=35 // pred_region
          %184 = dma.done [#allocation3], 2048
        $region40: #{tpu_custom_call.1} parent=35 // pred_fallthru
          _
        %p185 = scmp.lt.s32.totalorder %s19, 1
        %s186 = scalar_select %p185, %s19, 1
        %s187 = smul.addr %s186, 2
        %s188 = scalar_lea.vmem %s0, %s187
        %p189 = pneg %p40
        %p190 = pneg %p37
        %p191 = pneg %p61
        %p192 = pneg %p58
        %p193 = pneg %p82
        %p194 = pneg %p79
        %p195 = pneg %p103
        %p196 = pneg %p100
        %p197 = pneg %p129
        %p198 = pneg %p126
        %s199 = sand.u32 %s116, 1
        %s200 = scalar_lea.sflag [#allocation4], %s199
        %s201 = sand.u32 %s116, 1
        %s202 = scalar_lea.vmem [#allocation5], %s201
        %p203 = scmp.lt.s32.totalorder %s19, 1
        %s204 = scalar_select %p203, %s19, 1
        %s205 = smul.addr %s204, 2
        %s206 = scalar_lea.vmem %s0, %s205
        %v207 = vld [vmem:[%s206] sm:$0x3]
        %v208 = vld [vmem:[%s3] sm:$0x3]
        %v209 = vsub.f32 1.0, %v208
        %v210 = vld [vmem:[%s3] sm:$0xff]
        %v211 = vld [vmem:[%s3 + $0x8] sm:$0xff]
        %v212 = vld [vmem:[%s3 + $0x10] sm:$0xff]
        %v213 = vld [vmem:[%s3 + $0x18] sm:$0xff]
        %v214 = vld [vmem:[%s3 + $0x20] sm:$0xff]
        %v215 = vld [vmem:[%s3 + $0x28] sm:$0xff]
        %v216 = vld [vmem:[%s3 + $0x30] sm:$0xff]
        %v217 = vld [vmem:[%s3 + $0x38] sm:$0xff]
        %219 = vset.pattern.permute.xlu0 1
        %220 = vperm.xlu0 %219, %v210
        %v221 = vpop.permute.xlu0 %220
        %224 = vset.pattern.permute.xlu0 1
        %225 = vperm.xlu0 %224, %v211
        %v226 = vpop.permute.xlu0 %225
        %229 = vset.pattern.permute.xlu0 1
        %230 = vperm.xlu0 %229, %v212
        %v231 = vpop.permute.xlu0 %230
        %234 = vset.pattern.permute.xlu0 1
        %235 = vperm.xlu0 %234, %v213
        %v236 = vpop.permute.xlu0 %235
        %239 = vset.pattern.permute.xlu0 1
        %240 = vperm.xlu0 %239, %v214
        %v241 = vpop.permute.xlu0 %240
        %244 = vset.pattern.permute.xlu0 1
        %245 = vperm.xlu0 %244, %v215
        %v246 = vpop.permute.xlu0 %245
        %249 = vset.pattern.permute.xlu0 1
        %250 = vperm.xlu0 %249, %v216
        %v251 = vpop.permute.xlu0 %250
        %254 = vset.pattern.permute.xlu0 1
        %255 = vperm.xlu0 %254, %v217
        %v256 = vpop.permute.xlu0 %255
        %v258 = vlaneseq
        %v259 = vshrl.u32 %v258, 7
        %v260 = vsub.s32 0, %v259
        %v261 = vrot.slane %v207, %v260
        %v262 = vmul.f32 %v221, %v261
        %v263 = vmul.f32 %v226, %v261
        %v264 = vmul.f32 %v231, %v261
        %v265 = vmul.f32 %v236, %v261
        %v266 = vmul.f32 %v241, %v261
        %v267 = vmul.f32 %v246, %v261
        %v268 = vmul.f32 %v251, %v261
        %v269 = vmul.f32 %v256, %v261
        %270 = vset.pattern.permute.xlu0 3
        %271 = vperm.xlu0 %270, %v210
        %v272 = vpop.permute.xlu0 %271
        %274 = vset.pattern.permute.xlu0 3
        %275 = vperm.xlu0 %274, %v211
        %v276 = vpop.permute.xlu0 %275
        %278 = vset.pattern.permute.xlu0 3
        %279 = vperm.xlu0 %278, %v212
        %v280 = vpop.permute.xlu0 %279
        %282 = vset.pattern.permute.xlu0 3
        %283 = vperm.xlu0 %282, %v213
        %v284 = vpop.permute.xlu0 %283
        %286 = vset.pattern.permute.xlu0 3
        %287 = vperm.xlu0 %286, %v214
        %v288 = vpop.permute.xlu0 %287
        %290 = vset.pattern.permute.xlu0 3
        %291 = vperm.xlu0 %290, %v215
        %v292 = vpop.permute.xlu0 %291
        %294 = vset.pattern.permute.xlu0 3
        %295 = vperm.xlu0 %294, %v216
        %v296 = vpop.permute.xlu0 %295
        %298 = vset.pattern.permute.xlu0 3
        %299 = vperm.xlu0 %298, %v217
        %v300 = vpop.permute.xlu0 %299
        %v302 = vadd.f32 %v272, %v262
        %v303 = vadd.f32 %v276, %v263
        %v304 = vadd.f32 %v280, %v264
        %v305 = vadd.f32 %v284, %v265
        %v306 = vadd.f32 %v288, %v266
        %v307 = vadd.f32 %v292, %v267
        %v308 = vadd.f32 %v296, %v268
        %v309 = vadd.f32 %v300, %v269
        %310 = vset.pattern.permute.xlu0 2
        %311 = vperm.xlu0 %310, %v210
        %v312 = vpop.permute.xlu0 %311
        %314 = vset.pattern.permute.xlu0 2
        %315 = vperm.xlu0 %314, %v211
        %v316 = vpop.permute.xlu0 %315
        %318 = vset.pattern.permute.xlu0 2
        %319 = vperm.xlu0 %318, %v212
        %v320 = vpop.permute.xlu0 %319
        %322 = vset.pattern.permute.xlu0 2
        %323 = vperm.xlu0 %322, %v213
        %v324 = vpop.permute.xlu0 %323
        %326 = vset.pattern.permute.xlu0 2
        %327 = vperm.xlu0 %326, %v214
        %v328 = vpop.permute.xlu0 %327
        %330 = vset.pattern.permute.xlu0 2
        %331 = vperm.xlu0 %330, %v215
        %v332 = vpop.permute.xlu0 %331
        %334 = vset.pattern.permute.xlu0 2
        %335 = vperm.xlu0 %334, %v216
        %v336 = vpop.permute.xlu0 %335
        %338 = vset.pattern.permute.xlu0 2
        %339 = vperm.xlu0 %338, %v217
        %v340 = vpop.permute.xlu0 %339
        %v342 = vlaneseq
        %v343 = vshrl.u32 %v342, 7
        %v344 = vsub.s32 1, %v343
        %v345 = vrot.slane %v207, %v344
        %v346 = vmul.f32 %v312, %v345
        %v347 = vmul.f32 %v316, %v345
        %v348 = vmul.f32 %v320, %v345
        %v349 = vmul.f32 %v324, %v345
        %v350 = vmul.f32 %v328, %v345
        %v351 = vmul.f32 %v332, %v345
        %v352 = vmul.f32 %v336, %v345
        %v353 = vmul.f32 %v340, %v345
        %v354 = vadd.f32 %v302, %v346
        %v355 = vadd.f32 %v303, %v347
        %v356 = vadd.f32 %v304, %v348
        %v357 = vadd.f32 %v305, %v349
        %v358 = vadd.f32 %v306, %v350
        %v359 = vadd.f32 %v307, %v351
        %v360 = vadd.f32 %v308, %v352
        %v361 = vadd.f32 %v309, %v353
        %v362 = vmax.f32 %v354, 0.0
        %v363 = vmax.f32 %v355, 0.0
        %v364 = vmax.f32 %v356, 0.0
        %v365 = vmax.f32 %v357, 0.0
        %v366 = vmax.f32 %v358, 0.0
        %v367 = vmax.f32 %v359, 0.0
        %v368 = vmax.f32 %v360, 0.0
        %v369 = vmax.f32 %v361, 0.0
        %v370 = vld [vmem:[#allocation2] sm:$0xff]
        %v371 = vld [vmem:[#allocation2 + $0x8] sm:$0xff]
        %v372 = vld [vmem:[#allocation2 + $0x10] sm:$0xff]
        %v373 = vld [vmem:[#allocation2 + $0x18] sm:$0xff]
        %v374 = vld [vmem:[#allocation2 + $0x20] sm:$0xff]
        %v375 = vld [vmem:[#allocation2 + $0x28] sm:$0xff]
        %v376 = vld [vmem:[#allocation2 + $0x30] sm:$0xff]
        %v377 = vld [vmem:[#allocation2 + $0x38] sm:$0xff]
        %378 = vset.pattern.permute.xlu0 4
        %379 = vperm.xlu0 %378, %v210
        %v380 = vpop.permute.xlu0 %379
        %382 = vset.pattern.permute.xlu0 4
        %383 = vperm.xlu0 %382, %v211
        %v384 = vpop.permute.xlu0 %383
        %386 = vset.pattern.permute.xlu0 4
        %387 = vperm.xlu0 %386, %v212
        %v388 = vpop.permute.xlu0 %387
        %390 = vset.pattern.permute.xlu0 4
        %391 = vperm.xlu0 %390, %v213
        %v392 = vpop.permute.xlu0 %391
        %394 = vset.pattern.permute.xlu0 4
        %395 = vperm.xlu0 %394, %v214
        %v396 = vpop.permute.xlu0 %395
        %398 = vset.pattern.permute.xlu0 4
        %399 = vperm.xlu0 %398, %v215
        %v400 = vpop.permute.xlu0 %399
        %402 = vset.pattern.permute.xlu0 4
        %403 = vperm.xlu0 %402, %v216
        %v404 = vpop.permute.xlu0 %403
        %406 = vset.pattern.permute.xlu0 4
        %407 = vperm.xlu0 %406, %v217
        %v408 = vpop.permute.xlu0 %407
        %vm410 = vcmask 523264
        %v412 = vsel %vm410, %v370, 0
        %v415 = vsel %vm410, %v371, 0
        %v418 = vsel %vm410, %v372, 0
        %v421 = vsel %vm410, %v373, 0
        %v424 = vsel %vm410, %v374, 0
        %v427 = vsel %vm410, %v375, 0
        %v430 = vsel %vm410, %v376, 0
        %v433 = vsel %vm410, %v377, 0
        %435 = vmatprep.subr.mxu0 0.0
        %436 = vmatpush1.msra.mxu0 0.0
        %437 = vmatprep.subr.mxu0 0.0
        %438 = vmatpush1.msra.mxu0 0.0
        %439 = vmatprep.subr.mxu0 0.0
        %440 = vmatpush1.msra.mxu0 0.0
        %441 = vmatprep.subr.mxu0 0.0
        %442 = vmatpush1.msra.mxu0 0.0
        %443 = vmatprep.subr.mxu0 0.0
        %444 = vmatpush1.msra.mxu0 0.0
        %445 = vmatprep.subr.mxu0 0.0
        %446 = vmatpush1.msra.mxu0 0.0
        %447 = vmatprep.subr.mxu0 0.0
        %448 = vmatpush1.msra.mxu0 0.0
        %449 = vmatprep.subr.mxu0 0.0
        %450 = vmatpush1.msra.mxu0 0.0
        %451 = vmatprep.subr.mxu0 0.0
        %452 = vmatpush1.msra.mxu0 %v369
        %453 = vmatprep.subr.mxu0 0.0
        %454 = vmatpush1.msra.mxu0 %v368
        %455 = vmatprep.subr.mxu0 0.0
        %456 = vmatpush1.msra.mxu0 %v367
        %457 = vmatprep.subr.mxu0 0.0
        %458 = vmatpush1.msra.mxu0 %v366
        %459 = vmatprep.subr.mxu0 0.0
        %460 = vmatpush1.msra.mxu0 %v365
        %461 = vmatprep.subr.mxu0 0.0
        %462 = vmatpush1.msra.mxu0 %v364
        %463 = vmatprep.subr.mxu0 0.0
        %464 = vmatpush1.msra.mxu0 %v363
        %465 = vmatprep.subr.mxu0 0.0
        %466 = vmatpush1.msra.mxu0 %v362
        %467 = vmatprep.subr.mxu0 0.0
        %468 = vmatpush2.msra.mxu0 0.0
        %469 = vmatprep.subr.mxu0 0.0
        %470 = vmatpush2.msra.mxu0 0.0
        %471 = vmatprep.subr.mxu0 0.0
        %472 = vmatpush2.msra.mxu0 0.0
        %473 = vmatprep.subr.mxu0 0.0
        %474 = vmatpush2.msra.mxu0 0.0
        %475 = vmatprep.subr.mxu0 0.0
        %476 = vmatpush2.msra.mxu0 0.0
        %477 = vmatprep.subr.mxu0 0.0
        %478 = vmatpush2.msra.mxu0 0.0
        %479 = vmatprep.subr.mxu0 0.0
        %480 = vmatpush2.msra.mxu0 0.0
        %481 = vmatprep.subr.mxu0 0.0
        %482 = vmatpush2.msra.mxu0 0.0
        %483 = vmatprep.subr.mxu0 0.0
        %484 = vmatpush2.msra.mxu0 0.0
        %485 = vmatprep.subr.mxu0 0.0
        %486 = vmatpush2.msra.mxu0 0.0
        %487 = vmatprep.subr.mxu0 0.0
        %488 = vmatpush2.msra.mxu0 0.0
        %489 = vmatprep.subr.mxu0 0.0
        %490 = vmatpush2.msra.mxu0 0.0
        %491 = vmatprep.subr.mxu0 0.0
        %492 = vmatpush2.msra.mxu0 0.0
        %493 = vmatprep.subr.mxu0 0.0
        %494 = vmatpush2.msra.mxu0 0.0
        %495 = vmatprep.subr.mxu0 0.0
        %496 = vmatpush2.msra.mxu0 0.0
        %497 = vmatprep.subr.mxu0 0.0
        %498 = vmatpush2.msra.mxu0 0.0
        %499 = vmatprep.mubr.f32.mxu0 0.0
        %500 = vmatmul.mubr.f32.gmra.mxu0 %v412
        %v501 = vpop.f32.mrf.mxu0
        %v502 = vadd.f32 %v380, %v501
        %v503 = vpop.f32.mrf.mxu0
        %504 = vmatprep.mubr.f32.mxu0 0.0
        %505 = vmatmul.mubr.f32.gmra.mxu0 %v415
        %v506 = vpop.f32.mrf.mxu0
        %v507 = vadd.f32 %v384, %v506
        %v508 = vpop.f32.mrf.mxu0
        %509 = vmatprep.mubr.f32.mxu0 0.0
        %510 = vmatmul.mubr.f32.gmra.mxu0 %v418
        %v511 = vpop.f32.mrf.mxu0
        %v512 = vadd.f32 %v388, %v511
        %v513 = vpop.f32.mrf.mxu0
        %514 = vmatprep.mubr.f32.mxu0 0.0
        %515 = vmatmul.mubr.f32.gmra.mxu0 %v421
        %v516 = vpop.f32.mrf.mxu0
        %v517 = vadd.f32 %v392, %v516
        %v518 = vpop.f32.mrf.mxu0
        %519 = vmatprep.mubr.f32.mxu0 0.0
        %520 = vmatmul.mubr.f32.gmra.mxu0 %v424
        %v521 = vpop.f32.mrf.mxu0
        %v522 = vadd.f32 %v396, %v521
        %v523 = vpop.f32.mrf.mxu0
        %524 = vmatprep.mubr.f32.mxu0 0.0
        %525 = vmatmul.mubr.f32.gmra.mxu0 %v427
        %v526 = vpop.f32.mrf.mxu0
        %v527 = vadd.f32 %v400, %v526
        %v528 = vpop.f32.mrf.mxu0
        %529 = vmatprep.mubr.f32.mxu0 0.0
        %530 = vmatmul.mubr.f32.gmra.mxu0 %v430
        %v531 = vpop.f32.mrf.mxu0
        %v532 = vadd.f32 %v404, %v531
        %v533 = vpop.f32.mrf.mxu0
        %534 = vmatprep.mubr.f32.mxu0 0.0
        %535 = vmatmul.mubr.f32.gmra.mxu0 %v433
        %v536 = vpop.f32.mrf.mxu0
        %v537 = vadd.f32 %v408, %v536
        %v538 = vpop.f32.mrf.mxu0
        %539 = vdwg.mxu0
        %v540 = vmax.f32 %v502, 0.0
        %v541 = vmax.f32 %v507, 0.0
        %v542 = vmax.f32 %v512, 0.0
        %v543 = vmax.f32 %v517, 0.0
        %v544 = vmax.f32 %v522, 0.0
        %v545 = vmax.f32 %v527, 0.0
        %v546 = vmax.f32 %v532, 0.0
        %v547 = vmax.f32 %v537, 0.0
        %s548 = scalar_lea.vmem [#allocation2], 64
        %v549 = vld [vmem:[%s548] sm:$0xff]
        %v550 = vld [vmem:[%s548 + $0x8] sm:$0xff]
        %v551 = vld [vmem:[%s548 + $0x10] sm:$0xff]
        %v552 = vld [vmem:[%s548 + $0x18] sm:$0xff]
        %v553 = vld [vmem:[%s548 + $0x20] sm:$0xff]
        %v554 = vld [vmem:[%s548 + $0x28] sm:$0xff]
        %v555 = vld [vmem:[%s548 + $0x30] sm:$0xff]
        %v556 = vld [vmem:[%s548 + $0x38] sm:$0xff]
        %557 = vset.pattern.permute.xlu0 5
        %558 = vperm.xlu0 %557, %v210
        %v559 = vpop.permute.xlu0 %558
        %561 = vset.pattern.permute.xlu0 5
        %562 = vperm.xlu0 %561, %v211
        %v563 = vpop.permute.xlu0 %562
        %565 = vset.pattern.permute.xlu0 5
        %566 = vperm.xlu0 %565, %v212
        %v567 = vpop.permute.xlu0 %566
        %569 = vset.pattern.permute.xlu0 5
        %570 = vperm.xlu0 %569, %v213
        %v571 = vpop.permute.xlu0 %570
        %573 = vset.pattern.permute.xlu0 5
        %574 = vperm.xlu0 %573, %v214
        %v575 = vpop.permute.xlu0 %574
        %577 = vset.pattern.permute.xlu0 5
        %578 = vperm.xlu0 %577, %v215
        %v579 = vpop.permute.xlu0 %578
        %581 = vset.pattern.permute.xlu0 5
        %582 = vperm.xlu0 %581, %v216
        %v583 = vpop.permute.xlu0 %582
        %585 = vset.pattern.permute.xlu0 5
        %586 = vperm.xlu0 %585, %v217
        %v587 = vpop.permute.xlu0 %586
        %v590 = vsel %vm410, %v549, 0
        %v593 = vsel %vm410, %v550, 0
        %v596 = vsel %vm410, %v551, 0
        %v599 = vsel %vm410, %v552, 0
        %v602 = vsel %vm410, %v553, 0
        %v605 = vsel %vm410, %v554, 0
        %v608 = vsel %vm410, %v555, 0
        %v611 = vsel %vm410, %v556, 0
        %613 = vmatprep.subr.mxu0 0.0
        %614 = vmatpush1.msra.mxu0 0.0
        %615 = vmatprep.subr.mxu0 0.0
        %616 = vmatpush1.msra.mxu0 0.0
        %617 = vmatprep.subr.mxu0 0.0
        %618 = vmatpush1.msra.mxu0 0.0
        %619 = vmatprep.subr.mxu0 0.0
        %620 = vmatpush1.msra.mxu0 0.0
        %621 = vmatprep.subr.mxu0 0.0
        %622 = vmatpush1.msra.mxu0 0.0
        %623 = vmatprep.subr.mxu0 0.0
        %624 = vmatpush1.msra.mxu0 0.0
        %625 = vmatprep.subr.mxu0 0.0
        %626 = vmatpush1.msra.mxu0 0.0
        %627 = vmatprep.subr.mxu0 0.0
        %628 = vmatpush1.msra.mxu0 0.0
        %629 = vmatprep.subr.mxu0 0.0
        %630 = vmatpush1.msra.mxu0 %v547
        %631 = vmatprep.subr.mxu0 0.0
        %632 = vmatpush1.msra.mxu0 %v546
        %633 = vmatprep.subr.mxu0 0.0
        %634 = vmatpush1.msra.mxu0 %v545
        %635 = vmatprep.subr.mxu0 0.0
        %636 = vmatpush1.msra.mxu0 %v544
        %637 = vmatprep.subr.mxu0 0.0
        %638 = vmatpush1.msra.mxu0 %v543
        %639 = vmatprep.subr.mxu0 0.0
        %640 = vmatpush1.msra.mxu0 %v542
        %641 = vmatprep.subr.mxu0 0.0
        %642 = vmatpush1.msra.mxu0 %v541
        %643 = vmatprep.subr.mxu0 0.0
        %644 = vmatpush1.msra.mxu0 %v540
        %645 = vmatprep.subr.mxu0 0.0
        %646 = vmatpush2.msra.mxu0 0.0
        %647 = vmatprep.subr.mxu0 0.0
        %648 = vmatpush2.msra.mxu0 0.0
        %649 = vmatprep.subr.mxu0 0.0
        %650 = vmatpush2.msra.mxu0 0.0
        %651 = vmatprep.subr.mxu0 0.0
        %652 = vmatpush2.msra.mxu0 0.0
        %653 = vmatprep.subr.mxu0 0.0
        %654 = vmatpush2.msra.mxu0 0.0
        %655 = vmatprep.subr.mxu0 0.0
        %656 = vmatpush2.msra.mxu0 0.0
        %657 = vmatprep.subr.mxu0 0.0
        %658 = vmatpush2.msra.mxu0 0.0
        %659 = vmatprep.subr.mxu0 0.0
        %660 = vmatpush2.msra.mxu0 0.0
        %661 = vmatprep.subr.mxu0 0.0
        %662 = vmatpush2.msra.mxu0 0.0
        %663 = vmatprep.subr.mxu0 0.0
        %664 = vmatpush2.msra.mxu0 0.0
        %665 = vmatprep.subr.mxu0 0.0
        %666 = vmatpush2.msra.mxu0 0.0
        %667 = vmatprep.subr.mxu0 0.0
        %668 = vmatpush2.msra.mxu0 0.0
        %669 = vmatprep.subr.mxu0 0.0
        %670 = vmatpush2.msra.mxu0 0.0
        %671 = vmatprep.subr.mxu0 0.0
        %672 = vmatpush2.msra.mxu0 0.0
        %673 = vmatprep.subr.mxu0 0.0
        %674 = vmatpush2.msra.mxu0 0.0
        %675 = vmatprep.subr.mxu0 0.0
        %676 = vmatpush2.msra.mxu0 0.0
        %677 = vmatprep.mubr.f32.mxu0 0.0
        %678 = vmatmul.mubr.f32.gmra.mxu0 %v590
        %v679 = vpop.f32.mrf.mxu0
        %v680 = vadd.f32 %v559, %v679
        %v681 = vpop.f32.mrf.mxu0
        %682 = vmatprep.mubr.f32.mxu0 0.0
        %683 = vmatmul.mubr.f32.gmra.mxu0 %v593
        %v684 = vpop.f32.mrf.mxu0
        %v685 = vadd.f32 %v563, %v684
        %v686 = vpop.f32.mrf.mxu0
        %687 = vmatprep.mubr.f32.mxu0 0.0
        %688 = vmatmul.mubr.f32.gmra.mxu0 %v596
        %v689 = vpop.f32.mrf.mxu0
        %v690 = vadd.f32 %v567, %v689
        %v691 = vpop.f32.mrf.mxu0
        %692 = vmatprep.mubr.f32.mxu0 0.0
        %693 = vmatmul.mubr.f32.gmra.mxu0 %v599
        %v694 = vpop.f32.mrf.mxu0
        %v695 = vadd.f32 %v571, %v694
        %v696 = vpop.f32.mrf.mxu0
        %697 = vmatprep.mubr.f32.mxu0 0.0
        %698 = vmatmul.mubr.f32.gmra.mxu0 %v602
        %v699 = vpop.f32.mrf.mxu0
        %v700 = vadd.f32 %v575, %v699
        %v701 = vpop.f32.mrf.mxu0
        %702 = vmatprep.mubr.f32.mxu0 0.0
        %703 = vmatmul.mubr.f32.gmra.mxu0 %v605
        %v704 = vpop.f32.mrf.mxu0
        %v705 = vadd.f32 %v579, %v704
        %v706 = vpop.f32.mrf.mxu0
        %707 = vmatprep.mubr.f32.mxu0 0.0
        %708 = vmatmul.mubr.f32.gmra.mxu0 %v608
        %v709 = vpop.f32.mrf.mxu0
        %v710 = vadd.f32 %v583, %v709
        %v711 = vpop.f32.mrf.mxu0
        %712 = vmatprep.mubr.f32.mxu0 0.0
        %713 = vmatmul.mubr.f32.gmra.mxu0 %v611
        %v714 = vpop.f32.mrf.mxu0
        %v715 = vadd.f32 %v587, %v714
        %v716 = vpop.f32.mrf.mxu0
        %717 = vdwg.mxu0
        %v718 = vmax.f32 %v680, 0.0
        %v719 = vmax.f32 %v685, 0.0
        %v720 = vmax.f32 %v690, 0.0
        %v721 = vmax.f32 %v695, 0.0
        %v722 = vmax.f32 %v700, 0.0
        %v723 = vmax.f32 %v705, 0.0
        %v724 = vmax.f32 %v710, 0.0
        %v725 = vmax.f32 %v715, 0.0
        %v726 = vld [vmem:[%s2] sm:$0xff]
        %v727 = vld [vmem:[%s2 + $0x8] sm:$0xff]
        %v728 = vld [vmem:[%s3] sm:$0xff]
        %v729 = vld [vmem:[%s3 + $0x8] sm:$0xff]
        %731 = vset.pattern.permute.xlu0 6
        %732 = vperm.xlu0 %731, %v728
        %v733 = vpop.permute.xlu0 %732
        %736 = vset.pattern.permute.xlu0 6
        %737 = vperm.xlu0 %736, %v729
        %v738 = vpop.permute.xlu0 %737
        %v741 = vsel %vm410, %v726, 0
        %v744 = vsel %vm410, %v727, 0
        %746 = vmatprep.subr.mxu0 0.0
        %747 = vmatpush1.msra.mxu0 0.0
        %748 = vmatprep.subr.mxu0 0.0
        %749 = vmatpush1.msra.mxu0 0.0
        %750 = vmatprep.subr.mxu0 0.0
        %751 = vmatpush1.msra.mxu0 0.0
        %752 = vmatprep.subr.mxu0 0.0
        %753 = vmatpush1.msra.mxu0 0.0
        %754 = vmatprep.subr.mxu0 0.0
        %755 = vmatpush1.msra.mxu0 0.0
        %756 = vmatprep.subr.mxu0 0.0
        %757 = vmatpush1.msra.mxu0 0.0
        %758 = vmatprep.subr.mxu0 0.0
        %759 = vmatpush1.msra.mxu0 0.0
        %760 = vmatprep.subr.mxu0 0.0
        %761 = vmatpush1.msra.mxu0 0.0
        %762 = vmatprep.subr.mxu0 0.0
        %763 = vmatpush1.msra.mxu0 %v725
        %764 = vmatprep.subr.mxu0 0.0
        %765 = vmatpush1.msra.mxu0 %v724
        %766 = vmatprep.subr.mxu0 0.0
        %767 = vmatpush1.msra.mxu0 %v723
        %768 = vmatprep.subr.mxu0 0.0
        %769 = vmatpush1.msra.mxu0 %v722
        %770 = vmatprep.subr.mxu0 0.0
        %771 = vmatpush1.msra.mxu0 %v721
        %772 = vmatprep.subr.mxu0 0.0
        %773 = vmatpush1.msra.mxu0 %v720
        %774 = vmatprep.subr.mxu0 0.0
        %775 = vmatpush1.msra.mxu0 %v719
        %776 = vmatprep.subr.mxu0 0.0
        %777 = vmatpush1.msra.mxu0 %v718
        %778 = vmatprep.subr.mxu0 0.0
        %779 = vmatpush2.msra.mxu0 0.0
        %780 = vmatprep.subr.mxu0 0.0
        %781 = vmatpush2.msra.mxu0 0.0
        %782 = vmatprep.subr.mxu0 0.0
        %783 = vmatpush2.msra.mxu0 0.0
        %784 = vmatprep.subr.mxu0 0.0
        %785 = vmatpush2.msra.mxu0 0.0
        %786 = vmatprep.subr.mxu0 0.0
        %787 = vmatpush2.msra.mxu0 0.0
        %788 = vmatprep.subr.mxu0 0.0
        %789 = vmatpush2.msra.mxu0 0.0
        %790 = vmatprep.subr.mxu0 0.0
        %791 = vmatpush2.msra.mxu0 0.0
        %792 = vmatprep.subr.mxu0 0.0
        %793 = vmatpush2.msra.mxu0 0.0
        %794 = vmatprep.subr.mxu0 0.0
        %795 = vmatpush2.msra.mxu0 0.0
        %796 = vmatprep.subr.mxu0 0.0
        %797 = vmatpush2.msra.mxu0 0.0
        %798 = vmatprep.subr.mxu0 0.0
        %799 = vmatpush2.msra.mxu0 0.0
        %800 = vmatprep.subr.mxu0 0.0
        %801 = vmatpush2.msra.mxu0 0.0
        %802 = vmatprep.subr.mxu0 0.0
        %803 = vmatpush2.msra.mxu0 0.0
        %804 = vmatprep.subr.mxu0 0.0
        %805 = vmatpush2.msra.mxu0 0.0
        %806 = vmatprep.subr.mxu0 0.0
        %807 = vmatpush2.msra.mxu0 0.0
        %808 = vmatprep.subr.mxu0 0.0
        %809 = vmatpush2.msra.mxu0 0.0
        %810 = vmatprep.mubr.f32.mxu0 0.0
        %811 = vmatmul.mubr.f32.gmra.mxu0 %v741
        %v812 = vpop.f32.mrf.mxu0
        %v813 = vadd.f32 %v733, %v812
        %v814 = vpop.f32.mrf.mxu0
        %815 = vmatprep.mubr.f32.mxu0 0.0
        %816 = vmatmul.mubr.f32.gmra.mxu0 %v744
        %v817 = vpop.f32.mrf.mxu0
        %v818 = vadd.f32 %v738, %v817
        %v819 = vpop.f32.mrf.mxu0
        %820 = vdwg.mxu0
        %v821 = vtanh.pop %v813
        %823 = vset.pattern.permute.xlu0 0
        %824 = vperm.xlu0 %823, %v209
        %v825 = vpop.permute.xlu0 %824
        %v827 = vmul.f32 %v821, %v825
        %v828 = vmul.f32 %v818, %v825
        %830 = vset.pattern.permute.xlu0 0
        %831 = vperm.xlu0 %830, %v208
        %v832 = vpop.permute.xlu0 %831
        %v834 = vmul.f32 %v832, %v207
        %v835 = vsub.f32 %v207, %v828
        %v836 = vmul.f32 %v825, %v835
        %v837 = vsub.f32 0.0, %v827
        %v838 = vmul.f32 %v837, 1.442695
        %v839 = vpow.pop %v838
        %v840 = vmul.f32 %v836, %v839
        %v841 = vadd.f32 %v840, %v834
        %vm842 = vcmask 1041408
        %v843 = vsel %vm842, %v827, 0.0
        %v844 = vrot.slane %v843, 4
        %v845 = vadd.f32 %v843, %v844
        %v846 = vrot.slane %v845, 2
        %v847 = vadd.f32 %v845, %v846
        %v848 = vrot.slane %v847, 1
        %v849 = vadd.f32 %v847, %v848
        %v850 = vsub.f32 0.0, %v849
        %v851 = vmul.f32 %v841, %v841
        %v852 = vsel %vm842, %v851, 0.0
        %v853 = vrot.slane %v852, 4
        %v854 = vadd.f32 %v852, %v853
        %v855 = vrot.slane %v854, 2
        %v856 = vadd.f32 %v854, %v855
        %v857 = vrot.slane %v856, 1
        %v858 = vadd.f32 %v856, %v857
        %v859 = vmul.f32 %v858, -0.5
        %v860 = vsub.f32 %v859, 1.837877
        %v861 = vadd.f32 %v860, %v850
        %862 = vst [vmem:[%s202] sm:$0x1] %v861
        %s863 = sand.u32 %s116, 1
        %s864 = scalar_lea.sflag [#allocation4], %s863
        %s865 = sand.u32 %s116, 1
        %s866 = scalar_lea.vmem [#allocation5], %s865
        // Predicated region
        $region41: #{tpu_custom_call.1} parent=35 // pred_check
          %p867 = pneg %p126
        $region42: #{tpu_custom_call.1} parent=35 // pred_check_branch
          %869 = sbr.rel (%p867) target = $region44
        $region43: #{tpu_custom_call.1} parent=35 // pred_region
          %s871 = ssub.s32 16, 16
          %872 = vsyncadd %s864, %s871
          %s873 = smul.addr %s19, 16
          %s874 = scalar_lea.hbm %s4, %s873
          %s876 = sshll.u32 %s866, 4
          %s877 = int_to_ptr.vmem [resolvable:$true] %s876
          %879 = dma.vmem_to_hbm [thread:$0]  %s877, 16, %s874, %s864
        $region44: #{tpu_custom_call.1} parent=35 // pred_fallthru
          _
      $region36: #{tpu_custom_call.1} parent=5 // pred_fallthru
        _
      %p880 = scmp.le.s32.totalorder 2, %s14
      // Predicated region
      $region45: #{tpu_custom_call.1} parent=5 // pred_check
        %p881 = pneg %p880
      $region46: #{tpu_custom_call.1} parent=5 // pred_check_branch
        %883 = sbr.rel (%p881) target = $region48
      $region47: #{tpu_custom_call.1} parent=5 // pred_region
        %s884 = ssub.s32 %s14, 2
        // Predicated region
        $region49: #{tpu_custom_call.1} parent=47 // pred_check
          %p885 = pneg %p132
        $region50: #{tpu_custom_call.1} parent=47 // pred_check_branch
          %887 = sbr.rel (%p885) target = $region52
        $region51: #{tpu_custom_call.1} parent=47 // pred_region
          %s888 = sand.u32 %s117, 1
          %s889 = scalar_lea.sflag [#allocation4], %s888
          %s890 = sand.u32 %s117, 1
          %s891 = scalar_lea.vmem [#allocation5], %s890
          %892 = dma.done %s889, 16
        $region52: #{tpu_custom_call.1} parent=47 // pred_fallthru
          _
      $region48: #{tpu_custom_call.1} parent=5 // pred_fallthru
        _
    $region6: #{tpu_custom_call.1} parent=1 // loop_footer
      %s18 = sadd.s32 1, %s14
    $region7: #{tpu_custom_call.1} parent=1 // loop_footer_branch
      %13 = sbr.rel target = $region3
    $region8: #{tpu_custom_call.1} parent=1 // loop_exit
      _
    %893 = vsyncpa [#allocation3], 1
    %s894 = scalar_lea.sflag [#allocation3], 1
    %895 = vsyncpa %s894, 1
    %896 = vsyncpa [#allocation4], 1
    %s897 = scalar_lea.sflag [#allocation4], 1
    %898 = vsyncpa %s897, 1

</llo_original>
